<compile_context>
chip_gen: v7x
topology: tpu7x:2x2x1
jax: 0.10.0
libtpu: 0.0.40
codegen_flags: <defaults>
</compile_context>

<pallas_src>
import functools

import jax
import jax.numpy as jnp
from jax import lax
from jax.experimental import pallas as pl
from jax.experimental.pallas import tpu as pltpu


# --------------------------------------------------------------------------- #
# Kernel
# --------------------------------------------------------------------------- #
def _dense_kernel(x_ref, w_ref, b_ref, o_ref, acc_ref, *, activation):
    # x_ref : (TM, TK)      activations tile
    # w_ref : (TN, TK)      weight tile, PyTorch (out, in) layout -- no HBM transpose
    # b_ref : (1,  TN)      bias tile (float32)
    # o_ref : (TM, TN)      output tile
    # acc_ref: (TM, TN) f32 accumulator (persists across the K grid axis)
    k = pl.program_id(2)

    @pl.when(k == 0)
    def _init():
        acc_ref[...] = jnp.zeros_like(acc_ref)

    # y += x @ w^T, contracting the K (dim 1) of both operands on the MXU.
    acc_ref[...] += lax.dot_general(
        x_ref[...], w_ref[...],
        dimension_numbers=(((1,), (1,)), ((), ())),
        preferred_element_type=jnp.float32)

    @pl.when(k == pl.num_programs(2) - 1)
    def _finalize():
        y = acc_ref[...] + b_ref[...]          # bias broadcast over rows, f32
        if activation == "relu":
            y = jnp.maximum(y, 0.0)
        o_ref[...] = y.astype(o_ref.dtype)


# --------------------------------------------------------------------------- #
# Helpers
# --------------------------------------------------------------------------- #
def _round_up(x, m):
    return (x + m - 1) // m * m


def _aligned_divisor(dim, max_tile, align=128):
    """Largest multiple of `align` that divides `dim` and is <= max_tile (None if none)."""
    best = None
    t = align
    while t <= min(dim, max_tile):
        if dim % t == 0:
            best = t
        t += align
    return best


def _vmem_limit_bytes():
    """Per-generation scoped-VMEM limit (raise above the ~16/32 MiB defaults)."""
    cap = None
    try:
        info = pltpu.get_tpu_info()
        cap = getattr(info, "vmem_capacity_bytes", None)
    except Exception:
        cap = None
    if not cap:
        cap = 64 * 1024 * 1024          # conservative: v7x per-core VMEM
    # ~3/4 of physical, capped at 96 MiB (=> 96 MiB on v5e/v6e, 48 MiB on v7x).
    return min((3 * cap) // 4, 96 * 1024 * 1024)


def pad_dense_params(weight, bias, lane=128):
    """Pad out_features to a multiple of `lane`. Do this ONCE at parameter init so the
    per-call wrapper never rewrites weights in HBM."""
    n, _ = weight.shape
    n_pad = _round_up(n, lane)
    if n_pad != n:
        weight = jnp.pad(weight, ((0, n_pad - n), (0, 0)))
        bias = jnp.pad(bias, (0, n_pad - n))
    return weight, bias


def init_dense_params(key, in_features, out_features, dtype=jnp.float32):
    """nn.Linear-style uniform(-1/sqrt(fan_in), 1/sqrt(fan_in)) init."""
    kw, kb = jax.random.split(key)
    bound = 1.0 / (in_features ** 0.5)
    weight = jax.random.uniform(kw, (out_features, in_features), dtype,
                                minval=-bound, maxval=bound)
    bias = jax.random.uniform(kb, (out_features,), dtype,
                              minval=-bound, maxval=bound)
    return weight, bias


# --------------------------------------------------------------------------- #
# Wrapper
# --------------------------------------------------------------------------- #
def dense_forward(x, weight, bias, activation=None, *, out_features=None,
                  compute_dtype=None, tile_m=None, tile_n=None, tile_k=None):
    """y = x @ weight^T + bias (+ optional ReLU), as a tiled Pallas TPU matmul.

    x      : (B, in_features)
    weight : (out_features[, padded to x128], in_features)  -- PyTorch layout, NOT transposed
    bias   : (out_features[, padded],)
    out_features : true (unpadded) output width to slice back to; defaults to weight.shape[0]
    compute_dtype: e.g. jnp.bfloat16 for the v6e/v7x fast MXU path (f32 accumulation kept)
    """
    if activation not in (None, "relu"):
        raise ValueError(f"unsupported activation: {activation}")

    B, K = x.shape
    Np, K2 = weight.shape
    assert K == K2, (K, K2)
    out_dtype = x.dtype
    if out_features is None:
        out_features = Np

    # Lane-dense N: pad out_features to a multiple of 128 if the caller has not
    # pre-padded (prefer pad_dense_params once at init).
    if Np % 128 != 0:
        weight, bias = pad_dense_params(weight, bias)
        Np = weight.shape[0]

    # Optional low-precision compute (halves weight DMA bytes; MXU peak on v6e/v7x).
    if compute_dtype is not None and compute_dtype != x.dtype:
        x = x.astype(compute_dtype)
        weight = weight.astype(compute_dtype)
    bias2 = bias.reshape(1, Np).astype(jnp.float32)

    # ---- tile selection, VMEM-budgeted per TPU generation ------------------ #
    vmem_limit = _vmem_limit_bytes()
    budget = vmem_limit // 2                     # headroom for Mosaic internals

    if tile_m is None:
        tile_m = 256
    tile_m = min(tile_m, _round_up(B, 8))
    if B >= 16:
        # >= 2 "parallel" M-steps so megacore (v7x 2xTC) can shard the grid.
        tile_m = min(tile_m, max(8, _round_up(-(-B // 2), 8)))
    B_pad = _round_up(B, tile_m)

    tn_target = 512 if tile_n is None else tile_n
    tn = _aligned_divisor(Np, tn_target) or Np   # Np is a multiple of 128 -> >= 128

    tk_target = 1024 if tile_k is None else tile_k
    tk = _aligned_divisor(K, tk_target)
    if tk is None:
        tk = K                                   # block dim == full array dim is legal

    esz_in = jnp.dtype(x.dtype).itemsize
    esz_out = jnp.dtype(out_dtype).itemsize

    def _est(tm, tn_, tk_):
        return (2 * (tm * tk_ + tn_ * tk_) * esz_in    # double-buffered x, W tiles
                + 2 * tm * tn_ * esz_out               # double-buffered out tile
                + tm * tn_ * 4                         # f32 accumulator
                + 2 * tn_ * 4)                         # bias

    while _est(tile_m, tn, tk) > budget and tn > 128:
        tn = _aligned_divisor(Np, tn // 2) or 128
    while _est(tile_m, tn, tk) > budget and tk > 128 and K % 128 == 0:
        tk = _aligned_divisor(K, tk // 2) or 128

    # ---- pad batch to a whole number of M tiles ---------------------------- #
    if B_pad != B:
        x = jnp.pad(x, ((0, B_pad - B), (0, 0)))

    grid = (B_pad // tile_m, Np // tn, K // tk)
    kernel = functools.partial(_dense_kernel, activation=activation)

    out = pl.pallas_call(
        kernel,
        out_shape=jax.ShapeDtypeStruct((B_pad, Np), out_dtype),
        grid_spec=pltpu.PrefetchScalarGridSpec(
            num_scalar_prefetch=0,
            grid=grid,
            in_specs=[
                pl.BlockSpec((tile_m, tk), lambda i, j, k: (i, k)),   # x tile
                pl.BlockSpec((tn, tk), lambda i, j, k: (j, k)),       # W tile (N,K)
                pl.BlockSpec((1, tn), lambda i, j, k: (0, j)),        # bias tile
            ],
            out_specs=pl.BlockSpec((tile_m, tn), lambda i, j, k: (i, j)),
            scratch_shapes=[pltpu.VMEM((tile_m, tn), jnp.float32)],
        ),
        compiler_params=pltpu.CompilerParams(
            dimension_semantics=("parallel", "parallel", "arbitrary"),
            vmem_limit_bytes=vmem_limit,
        ),
    )(x, weight, bias2)

    return out[:B, :out_features]


# --------------------------------------------------------------------------- #
# Demo / correctness checks
# --------------------------------------------------------------------------- #
if __name__ == "__main__":
    key = jax.random.PRNGKey(0)
    keys = jax.random.split(key, 16)

    # ---- 1. single Dense layer (shapes from the original demo) ------------- #
    batch, in_features, out_features = 8, 32, 16
    x = jax.random.normal(keys[0], (batch, in_features), jnp.float32)
    w, b = init_dense_params(keys[1], in_features, out_features)

    ref = x @ w.T + b
    y_none = dense_forward(x, w, b, activation=None)
    y_relu = dense_forward(x, w, b, activation="relu")
    y_bf16 = dense_forward(x, w, b, compute_dtype=jnp.bfloat16)

    assert jnp.allclose(y_none, ref, atol=1e-4, rtol=1e-4)
    assert jnp.allclose(y_relu, jnp.maximum(ref, 0.0), atol=1e-4, rtol=1e-4)
    assert jnp.allclose(y_bf16, ref, atol=3e-2, rtol=3e-2)

    # ---- 2. PoseTransitionNetwork.predict_pose_change built from the kernel - #
    k_obj, action_dim, batch_p = 2, 4, 2
    pose_dim = 6 * k_obj
    layer_dims = {
        "Fc1_a": (pose_dim, 128), "Fc2_a": (128, 256),
        "Fc1_b": (action_dim, 128), "Fc2_b": (128, 256),
        "Fc1_ab": (512, 128), "Fc2_ab": (128, 64), "Fc3_ab": (64, pose_dim),
    }
    params = {}
    for (name, (fin, fout)), kk in zip(layer_dims.items(), keys[2:9]):
        w_, b_ = init_dense_params(kk, fin, fout)
        wp, bp = pad_dense_params(w_, b_)        # pad out_features ONCE at init
        params[name] = (w_, b_, wp, bp, fout)

    poses = jax.random.normal(keys[9], (batch_p, pose_dim), jnp.float32)
    action = jax.random.normal(keys[10], (batch_p, action_dim), jnp.float32)

    def dense_p(name, v):
        _, _, wp, bp, fout = params[name]
        return dense_forward(v, wp, bp, out_features=fout)

    def dense_r(name, v):
        w_, b_, _, _, _ = params[name]
        return v @ w_.T + b_

    p_enc = dense_p("Fc2_a", dense_p("Fc1_a", poses))
    u_enc = dense_p("Fc2_b", dense_p("Fc1_b", action))
    l_cat = jnp.concatenate((p_enc, u_enc), axis=-1)
    delta_p = dense_p("Fc3_ab", dense_p("Fc2_ab", dense_p("Fc1_ab", l_cat)))

    p_enc_r = dense_r("Fc2_a", dense_r("Fc1_a", poses))
    u_enc_r = dense_r("Fc2_b", dense_r("Fc1_b", action))
    l_cat_r = jnp.concatenate((p_enc_r, u_enc_r), axis=-1)
    delta_p_r = dense_r("Fc3_ab", dense_r("Fc2_ab", dense_r("Fc1_ab", l_cat_r)))

    jax.block_until_ready((y_none, y_relu, y_bf16, delta_p))
    assert jnp.allclose(delta_p, delta_p_r, atol=2e-2, rtol=2e-2)

    print("KERNEL_OK")
</pallas_src>

<mosaic_0001>
module attributes {stable_mosaic.version = 11 : i64} {
  func.func @_dense_kernel(%arg0: i32, %arg1: i32, %arg2: i32, %arg3: memref<8x32xf32, #tpu.memory_space<vmem>>, %arg4: memref<128x32xf32, #tpu.memory_space<vmem>>, %arg5: memref<1x128xf32, #tpu.memory_space<vmem>>, %arg6: memref<8x128xf32, #tpu.memory_space<vmem>>, %arg7: memref<8x128xf32, #tpu.memory_space<vmem>>) attributes {dimension_semantics = [#tpu.dimension_semantics<parallel>, #tpu.dimension_semantics<parallel>, #tpu.dimension_semantics<arbitrary>], iteration_bounds = array<i64: 1, 1, 1>, scalar_prefetch = 0 : i64, scratch_operands = 1 : i64, tpu.core_type = #tpu.core_type<tc>, window_params = [{transform_indices = @transform_0, window_bounds = array<i64: 8, 32>}, {transform_indices = @transform_1, window_bounds = array<i64: 128, 32>}, {transform_indices = @transform_2, window_bounds = array<i64: 1, 128>}, {transform_indices = @transform_3, window_bounds = array<i64: 8, 128>}]} {
    %c0_i32 = arith.constant 0 : i32
    %0 = arith.cmpi eq, %arg2, %c0_i32 : i32
    %1 = arith.extui %0 : i1 to i32
    %c0_i32_0 = arith.constant 0 : i32
    %2 = arith.cmpi ne, %1, %c0_i32_0 : i32
    scf.if %2 {
      %cst_10 = arith.constant 0.000000e+00 : f32
      %12 = vector.broadcast %cst_10 : f32 to vector<8x128xf32>
      %c0_11 = arith.constant 0 : index
      %c0_12 = arith.constant 0 : index
      %13 = vector.load %arg7[%c0_11, %c0_12] : memref<8x128xf32, #tpu.memory_space<vmem>>, vector<8x128xf32>
      tpu.vector_store %arg7[%c0_11, %c0_12], %12 {strides = array<i32>} : memref<8x128xf32, #tpu.memory_space<vmem>>, vector<8x128xf32>,
    } else {
    }
    %c0 = arith.constant 0 : index
    %c0_1 = arith.constant 0 : index
    %3 = vector.load %arg7[%c0, %c0_1] : memref<8x128xf32, #tpu.memory_space<vmem>>, vector<8x128xf32>
    %c0_2 = arith.constant 0 : index
    %c0_3 = arith.constant 0 : index
    %4 = vector.load %arg3[%c0_2, %c0_3] : memref<8x32xf32, #tpu.memory_space<vmem>>, vector<8x32xf32>
    %c0_4 = arith.constant 0 : index
    %c0_5 = arith.constant 0 : index
    %5 = vector.load %arg4[%c0_4, %c0_5] : memref<128x32xf32, #tpu.memory_space<vmem>>, vector<128x32xf32>
    %cst = arith.constant dense<0.000000e+00> : vector<8x128xf32>
    %6 = tpu.matmul %4, %5, %cst {dimension_numbers = #tpu.dot_dimension_numbers<[1], [1], [0], [0], [0, 0, 1, 0], [], []>} : vector<8x32xf32>, vector<128x32xf32>, vector<8x128xf32> -> vector<8x128xf32>
    %7 = arith.addf %3, %6 : vector<8x128xf32>
    %c0_6 = arith.constant 0 : index
    %c0_7 = arith.constant 0 : index
    %8 = vector.load %arg7[%c0_6, %c0_7] : memref<8x128xf32, #tpu.memory_space<vmem>>, vector<8x128xf32>
    tpu.vector_store %arg7[%c0_6, %c0_7], %7 {strides = array<i32>} : memref<8x128xf32, #tpu.memory_space<vmem>>, vector<8x128xf32>,
    %c0_i32_8 = arith.constant 0 : i32
    %9 = arith.cmpi eq, %arg2, %c0_i32_8 : i32
    %10 = arith.extui %9 : i1 to i32
    %c0_i32_9 = arith.constant 0 : i32
    %11 = arith.cmpi ne, %10, %c0_i32_9 : i32
    scf.if %11 {
      %c0_10 = arith.constant 0 : index
      %c0_11 = arith.constant 0 : index
      %12 = vector.load %arg7[%c0_10, %c0_11] : memref<8x128xf32, #tpu.memory_space<vmem>>, vector<8x128xf32>
      %c0_12 = arith.constant 0 : index
      %c0_13 = arith.constant 0 : index
      %13 = vector.load %arg5[%c0_12, %c0_13] : memref<1x128xf32, #tpu.memory_space<vmem>>, vector<1x128xf32>
      %14 = vector.broadcast %13 : vector<1x128xf32> to vector<8x128xf32>
      %15 = arith.addf %12, %14 : vector<8x128xf32>
      %c0_14 = arith.constant 0 : index
      %c0_15 = arith.constant 0 : index
      %16 = vector.load %arg6[%c0_14, %c0_15] : memref<8x128xf32, #tpu.memory_space<vmem>>, vector<8x128xf32>
      tpu.vector_store %arg6[%c0_14, %c0_15], %15 {strides = array<i32>} : memref<8x128xf32, #tpu.memory_space<vmem>>, vector<8x128xf32>,
    } else {
    }
    return
  }
  func.func @transform_0(%arg0: i32, %arg1: i32, %arg2: i32) -> (i32, i32) {
    %c0_i32 = arith.constant 0 : i32
    return %arg0, %arg2 : i32, i32
  }
  func.func @transform_1(%arg0: i32, %arg1: i32, %arg2: i32) -> (i32, i32) {
    %c0_i32 = arith.constant 0 : i32
    return %arg1, %arg2 : i32, i32
  }
  func.func @transform_2(%arg0: i32, %arg1: i32, %arg2: i32) -> (i32, i32) {
    %c0_i32 = arith.constant 0 : i32
    %c0_i32_0 = arith.constant 0 : i32
    return %c0_i32, %arg1 : i32, i32
  }
  func.func @transform_3(%arg0: i32, %arg1: i32, %arg2: i32) -> (i32, i32) {
    %c0_i32 = arith.constant 0 : i32
    return %arg0, %arg1 : i32, i32
  }
}

</mosaic_0001>

<llo_original>
// kernel: tpu_custom_call.1
$region0: #{tpu_custom_call.1}
  #allocation0 [shape = 'u32[]', space=smem, size = 0x4, offset = 0x4, fixed_abs, tag = 'smem constant byte address 0x4 - core index']
  #allocation1 [shape = 'u32[144,128]{1,0:T(1,128)}', space=vmem, size = 0x12000, scoped, tag = 'internal scratch']
  #allocation2 [shape = 'f32[8,128]{1,0:T(8,128)}', space=vmem, size = 0x1000, scoped, tag = 'scratch operand']
  %s0 = inlined_call_operand.vmem [shape: f32[8,32], index: 0, kind: input, shape index: {}]
  %s1 = inlined_call_operand.vmem [shape: f32[128,32], index: 1, kind: input, shape index: {}]
  %s2 = inlined_call_operand.vmem [shape: f32[1,128], index: 2, kind: input, shape index: {}]
  %s3 = inlined_call_operand.hbm [shape: f32[8,128], index: 3, kind: output, shape index: {}]
  %s4 = sld [smem:[#allocation0]]
  $region30: #{tpu_custom_call.1} parent=0
    _
  %s6 = ssub.s32 1, %s4
  %s7 = scalar_select 0, %s6, %s4
  $region1: #{tpu_custom_call.1} parent=0
    #allocation3 [shape = 'u8[4096]{0}', space=vmem, size = 0x1000, scoped, tag = 'output window, operand 0, single buffered']
    #allocation4 [shape = 's32[1]{0}', space=sflag, size = 0x4, scoped, tag = 'scoped memory for tpu_custom_call.1']
    %8 = vsyncpa [#allocation4], 0
    // Predicated region
    $region2: #{tpu_custom_call.1} parent=1 // pred_check
      _
    $region3: #{tpu_custom_call.1} parent=1 // pred_check_branch
      %10 = sbr.rel (0) target = $region5
    $region4: #{tpu_custom_call.1} parent=1 // pred_region
      _
    $region5: #{tpu_custom_call.1} parent=1 // pred_fallthru
      _
    // Predicated region
    $region6: #{tpu_custom_call.1} parent=1 // pred_check
      _
    $region7: #{tpu_custom_call.1} parent=1 // pred_check_branch
      %12 = sbr.rel (0) target = $region9
    $region8: #{tpu_custom_call.1} parent=1 // pred_region
      _
    $region9: #{tpu_custom_call.1} parent=1 // pred_fallthru
      _
    // Predicated region
    $region10: #{tpu_custom_call.1} parent=1 // pred_check
      _
    $region11: #{tpu_custom_call.1} parent=1 // pred_check_branch
      %14 = sbr.rel (0) target = $region13
    $region12: #{tpu_custom_call.1} parent=1 // pred_region
      _
    $region13: #{tpu_custom_call.1} parent=1 // pred_fallthru
      _
    %p15 = scmp.eq.s32.totalorder 0, 0
    // Predicated region
    $region14: #{tpu_custom_call.1} parent=1 // pred_check
      %p16 = pneg %p15
    $region15: #{tpu_custom_call.1} parent=1 // pred_check_branch
      %18 = sbr.rel (%p16) target = $region17
    $region16: #{tpu_custom_call.1} parent=1 // pred_region
      %19 = vst [vmem:[#allocation2] sm:$0xff] 0.0
    $region17: #{tpu_custom_call.1} parent=1 // pred_fallthru
      _
    %v20 = vld [vmem:[#allocation2] sm:$0xff]
    %v21 = vld [vmem:[%s0] sm:$0xff]
    %v22 = vld [vmem:[%s1] sm:$0xff]
    %v23 = vld [vmem:[%s1 + $0x8] sm:$0xff]
    %v24 = vld [vmem:[%s1 + $0x10] sm:$0xff]
    %v25 = vld [vmem:[%s1 + $0x18] sm:$0xff]
    %v26 = vld [vmem:[%s1 + $0x20] sm:$0xff]
    %v27 = vld [vmem:[%s1 + $0x28] sm:$0xff]
    %v28 = vld [vmem:[%s1 + $0x30] sm:$0xff]
    %v29 = vld [vmem:[%s1 + $0x38] sm:$0xff]
    %v30 = vld [vmem:[%s1 + $0x40] sm:$0xff]
    %v31 = vld [vmem:[%s1 + $0x48] sm:$0xff]
    %v32 = vld [vmem:[%s1 + $0x50] sm:$0xff]
    %v33 = vld [vmem:[%s1 + $0x58] sm:$0xff]
    %v34 = vld [vmem:[%s1 + $0x60] sm:$0xff]
    %v35 = vld [vmem:[%s1 + $0x68] sm:$0xff]
    %v36 = vld [vmem:[%s1 + $0x70] sm:$0xff]
    %v37 = vld [vmem:[%s1 + $0x78] sm:$0xff]
    %vm38 = vcmask 261120
    %v40 = vsel %vm38, %v21, 0
    %v43 = vsel %vm38, %v22, 0
    %v46 = vsel %vm38, %v23, 0
    %v49 = vsel %vm38, %v24, 0
    %v52 = vsel %vm38, %v25, 0
    %v55 = vsel %vm38, %v26, 0
    %v58 = vsel %vm38, %v27, 0
    %v61 = vsel %vm38, %v28, 0
    %v64 = vsel %vm38, %v29, 0
    %v67 = vsel %vm38, %v30, 0
    %v70 = vsel %vm38, %v31, 0
    %v73 = vsel %vm38, %v32, 0
    %v76 = vsel %vm38, %v33, 0
    %v79 = vsel %vm38, %v34, 0
    %v82 = vsel %vm38, %v35, 0
    %v85 = vsel %vm38, %v36, 0
    %v88 = vsel %vm38, %v37, 0
    %90 = vmatprep.subr.mxu0 0.0
    %91 = vmatpush1.xpose.msra.mxu0 %v43
    %92 = vmatprep.subr.mxu0 0.0
    %93 = vmatpush1.xpose.msra.mxu0 %v46
    %94 = vmatprep.subr.mxu0 0.0
    %95 = vmatpush1.xpose.msra.mxu0 %v49
    %96 = vmatprep.subr.mxu0 0.0
    %97 = vmatpush1.xpose.msra.mxu0 %v52
    %98 = vmatprep.subr.mxu0 0.0
    %99 = vmatpush1.xpose.msra.mxu0 %v55
    %100 = vmatprep.subr.mxu0 0.0
    %101 = vmatpush1.xpose.msra.mxu0 %v58
    %102 = vmatprep.subr.mxu0 0.0
    %103 = vmatpush1.xpose.msra.mxu0 %v61
    %104 = vmatprep.subr.mxu0 0.0
    %105 = vmatpush1.xpose.msra.mxu0 %v64
    %106 = vmatprep.subr.mxu0 0.0
    %107 = vmatpush1.xpose.msra.mxu0 %v67
    %108 = vmatprep.subr.mxu0 0.0
    %109 = vmatpush1.xpose.msra.mxu0 %v70
    %110 = vmatprep.subr.mxu0 0.0
    %111 = vmatpush1.xpose.msra.mxu0 %v73
    %112 = vmatprep.subr.mxu0 0.0
    %113 = vmatpush1.xpose.msra.mxu0 %v76
    %114 = vmatprep.subr.mxu0 0.0
    %115 = vmatpush1.xpose.msra.mxu0 %v79
    %116 = vmatprep.subr.mxu0 0.0
    %117 = vmatpush1.xpose.msra.mxu0 %v82
    %118 = vmatprep.subr.mxu0 0.0
    %119 = vmatpush1.xpose.msra.mxu0 %v85
    %120 = vmatprep.subr.mxu0 0.0
    %121 = vmatpush1.xpose.msra.mxu0 %v88
    %122 = vmatprep.subr.mxu0 0.0
    %123 = vmatpush1.xpose.msra.mxu0 0.0
    %124 = vmatprep.subr.mxu0 0.0
    %125 = vmatpush1.xpose.msra.mxu0 0.0
    %126 = vmatprep.subr.mxu0 0.0
    %127 = vmatpush1.xpose.msra.mxu0 0.0
    %128 = vmatprep.subr.mxu0 0.0
    %129 = vmatpush1.xpose.msra.mxu0 0.0
    %130 = vmatprep.subr.mxu0 0.0
    %131 = vmatpush1.xpose.msra.mxu0 0.0
    %132 = vmatprep.subr.mxu0 0.0
    %133 = vmatpush1.xpose.msra.mxu0 0.0
    %134 = vmatprep.subr.mxu0 0.0
    %135 = vmatpush1.xpose.msra.mxu0 0.0
    %136 = vmatprep.subr.mxu0 0.0
    %137 = vmatpush1.xpose.msra.mxu0 0.0
    %138 = vmatprep.subr.mxu0 0.0
    %139 = vmatpush1.xpose.msra.mxu0 0.0
    %140 = vmatprep.subr.mxu0 0.0
    %141 = vmatpush1.xpose.msra.mxu0 0.0
    %142 = vmatprep.subr.mxu0 0.0
    %143 = vmatpush1.xpose.msra.mxu0 0.0
    %144 = vmatprep.subr.mxu0 0.0
    %145 = vmatpush1.xpose.msra.mxu0 0.0
    %146 = vmatprep.subr.mxu0 0.0
    %147 = vmatpush1.xpose.msra.mxu0 0.0
    %148 = vmatprep.subr.mxu0 0.0
    %149 = vmatpush1.xpose.msra.mxu0 0.0
    %150 = vmatprep.subr.mxu0 0.0
    %151 = vmatpush1.xpose.msra.mxu0 0.0
    %152 = vmatprep.subr.mxu0 0.0
    %153 = vmatpush1.xpose.msra.mxu0 0.0
    %154 = vmatprep.mubr.f32.mxu0 0.0
    %155 = vmatmul.mubr.f32.gmra.mrb[0].mxu0 %v40
    %v156 = vpop.f32.mrb[0].mxu0
    %v157 = vadd.f32 0.0, %v156
    %v158 = vpop.f32.mrb[0].mxu0
    %159 = vdwg.mxu0
    %v160 = vadd.f32 %v20, %v157
    %161 = vst [vmem:[#allocation2] sm:$0xff] %v160
    // Predicated region
    $region18: #{tpu_custom_call.1} parent=1 // pred_check
      %p162 = pneg %p15
    $region19: #{tpu_custom_call.1} parent=1 // pred_check_branch
      %164 = sbr.rel (%p162) target = $region21
    $region20: #{tpu_custom_call.1} parent=1 // pred_region
      %v165 = vld [vmem:[#allocation2] sm:$0xff]
      %v166 = vld [vmem:[%s2] sm:$0x1]
      %v168 = vlaneseq
      %v169 = vshrl.u32 %v168, 7
      %v170 = vsub.s32 0, %v169
      %v171 = vrot.slane %v166, %v170
      %v173 = vadd.f32 %v165, %v171
      %174 = vst [vmem:[#allocation3] sm:$0xff] %v173
    $region21: #{tpu_custom_call.1} parent=1 // pred_fallthru
      _
    // Predicated region
    $region22: #{tpu_custom_call.1} parent=1 // pred_check
      _
    $region23: #{tpu_custom_call.1} parent=1 // pred_check_branch
      %176 = sbr.rel (0) target = $region25
    $region24: #{tpu_custom_call.1} parent=1 // pred_region
      %s178 = ssub.s32 128, 128
      %179 = vsyncadd [#allocation4], %s178
      %s181 = sshll.u32 [#allocation3], 4
      %s182 = int_to_ptr.vmem [resolvable:$true] %s181
      %184 = dma.vmem_to_hbm [thread:$0]  %s182, 128, %s3, [#allocation4]
    $region25: #{tpu_custom_call.1} parent=1 // pred_fallthru
      _
    // Predicated region
    $region26: #{tpu_custom_call.1} parent=1 // pred_check
      _
    $region27: #{tpu_custom_call.1} parent=1 // pred_check_branch
      %186 = sbr.rel (0) target = $region29
    $region28: #{tpu_custom_call.1} parent=1 // pred_region
      %187 = dma.done [#allocation4], 128
    $region29: #{tpu_custom_call.1} parent=1 // pred_fallthru
      _
    %188 = vsyncpa [#allocation4], 1

</llo_original>
